<compile_context>
chip_gen: v7x
topology: tpu7x:2x2x1
jax: 0.10.0
libtpu: 0.0.40
codegen_flags: <defaults>
</compile_context>

<pallas_src>
import jax
import jax.numpy as jnp
from jax.experimental import pallas as pl
from jax.experimental.pallas import tpu as pltpu

LANE = 128


def _round_up(v, m):
    return ((v + m - 1) // m) * m


def _focal_tversky_sums_kernel(x_ref, t_ref, out_ref, pt_acc, sp_acc, st_acc):
    """Accumulates lane-wise sum(p*t), sum(p), sum(t) over the inner grid axis."""
    k = pl.program_id(1)

    @pl.when(k == 0)
    def _init():
        pt_acc[...] = jnp.zeros_like(pt_acc)
        sp_acc[...] = jnp.zeros_like(sp_acc)
        st_acc[...] = jnp.zeros_like(st_acc)

    p = jax.nn.sigmoid(x_ref[...].astype(jnp.float32))   # EUP sigmoid
    t = t_ref[...].astype(jnp.float32)

    # One multiply + three sublane reductions per tile; lane-wise partials.
    pt_acc[...] += jnp.sum(p * t, axis=0, keepdims=True)
    sp_acc[...] += jnp.sum(p, axis=0, keepdims=True)
    st_acc[...] += jnp.sum(t, axis=0, keepdims=True)

    @pl.when(k == pl.num_programs(1) - 1)
    def _store():
        out_ref[0:1, :] = pt_acc[...]
        out_ref[1:2, :] = sp_acc[...]
        out_ref[2:3, :] = st_acc[...]


def focal_tversky_loss(inputs, targets, alpha=0.3, beta=0.7, gamma=0.75,
                       tile_rows=2048, num_core_splits=2):
    """Pallas implementation of FocalTverskyLoss.forward (returns f32 scalar)."""
    x = jnp.reshape(inputs, (-1,))
    t = jnp.reshape(targets, (-1,))
    if not jnp.issubdtype(x.dtype, jnp.floating):
        x = x.astype(jnp.float32)
    if t.dtype == jnp.bool_:
        t = t.astype(jnp.float32)
    n = x.shape[0]

    # Tile geometry: (tile_rows_eff, 128) blocks; shrink the tile for small
    # inputs so we do not over-pad, keep sublane dim a multiple of 8.
    rows = pl.cdiv(n, LANE)
    tile_rows_eff = _round_up(max(min(tile_rows, _round_up(rows, 8)), 8), 8)
    num_tiles = pl.cdiv(rows, tile_rows_eff)
    num_splits = num_core_splits if num_tiles >= num_core_splits else 1
    tiles_per_split = pl.cdiv(num_tiles, num_splits)
    rows_pad = num_splits * tiles_per_split * tile_rows_eff
    pad = rows_pad * LANE - n

    if pad:
        # sigmoid(finfo.min) == 0 exactly, target pad == 0 => padding adds 0
        # to every accumulated sum (no mask stream needed).
        x = jnp.pad(x, (0, pad), constant_values=jnp.finfo(x.dtype).min)
        t = jnp.pad(t, (0, pad), constant_values=0)

    x2 = x.reshape(rows_pad, LANE)
    t2 = t.reshape(rows_pad, LANE)

    # VMEM budget: 2 double-buffered input blocks (+ headroom), clipped so it
    # stays safe on v7x's smaller physical VMEM.
    per_step_in_bytes = tile_rows_eff * LANE * (x2.dtype.itemsize + t2.dtype.itemsize)
    vmem_limit = int(min(max(2 * per_step_in_bytes + (2 << 20), 16 << 20), 48 << 20))

    tps = tiles_per_split
    in_map = lambda s, k: (s * tps + k, 0)

    parts = pl.pallas_call(
        _focal_tversky_sums_kernel,
        out_shape=jax.ShapeDtypeStruct((num_splits, 3, LANE), jnp.float32),
        grid_spec=pltpu.PrefetchScalarGridSpec(
            num_scalar_prefetch=0,
            grid=(num_splits, tiles_per_split),
            in_specs=[
                pl.BlockSpec((tile_rows_eff, LANE), in_map),
                pl.BlockSpec((tile_rows_eff, LANE), in_map),
            ],
            out_specs=pl.BlockSpec((None, 3, LANE), lambda s, k: (s, 0, 0)),
            scratch_shapes=[
                pltpu.VMEM((1, LANE), jnp.float32),   # sum(p * t)
                pltpu.VMEM((1, LANE), jnp.float32),   # sum(p)
                pltpu.VMEM((1, LANE), jnp.float32),   # sum(t)
            ],
        ),
        compiler_params=pltpu.CompilerParams(
            dimension_semantics=("parallel", "arbitrary"),
            vmem_limit_bytes=vmem_limit),
    )(x2, t2)

    # Tiny finalize in plain JAX (cross-lane + cross-core reduction, scalar math).
    sums = jnp.sum(parts, axis=(0, 2))                  # (3,)
    tp, sum_p, sum_t = sums[0], sums[1], sums[2]
    fp = sum_p - tp                                     # sum(p * (1 - t))
    fn = sum_t - tp                                     # sum((1 - p) * t)
    tversky = tp / (tp + alpha * fp + beta * fn)
    return (1.0 - tversky) ** gamma


def _reference(inputs, targets, alpha=0.3, beta=0.7, gamma=0.75):
    p = jax.nn.sigmoid(inputs.astype(jnp.float32)).reshape(-1)
    t = targets.astype(jnp.float32).reshape(-1)
    tp = jnp.sum(p * t)
    fp = jnp.sum(p * (1.0 - t))
    fn = jnp.sum((1.0 - p) * t)
    tversky = tp / (tp + alpha * fp + beta * fn)
    return (1.0 - tversky) ** gamma


if __name__ == "__main__":
    key = jax.random.PRNGKey(0)
    k1, k2 = jax.random.split(key)

    # Small segmentation-style logit/target pair (NCHW).
    logits = jax.random.normal(k1, (2, 4, 16, 16), dtype=jnp.float32)
    targets = (jax.random.uniform(k2, (2, 4, 16, 16)) > 0.5).astype(jnp.float32)

    loss = focal_tversky_loss(logits, targets)
    loss = jax.block_until_ready(loss)

    ref = _reference(logits, targets)
    assert jnp.allclose(loss, ref, rtol=1e-5, atol=1e-6), (loss, ref)

    print("KERNEL_OK")
</pallas_src>

<mosaic_0001>
module attributes {stable_mosaic.version = 11 : i64} {
  func.func @_focal_tversky_sums_kernel(%arg0: i32, %arg1: i32, %arg2: memref<16x128xf32, #tpu.memory_space<vmem>>, %arg3: memref<16x128xf32, #tpu.memory_space<vmem>>, %arg4: memref<1x3x128xf32, #tpu.memory_space<vmem>>, %arg5: memref<1x128xf32, #tpu.memory_space<vmem>>, %arg6: memref<1x128xf32, #tpu.memory_space<vmem>>, %arg7: memref<1x128xf32, #tpu.memory_space<vmem>>) attributes {dimension_semantics = [#tpu.dimension_semantics<parallel>, #tpu.dimension_semantics<arbitrary>], iteration_bounds = array<i64: 1, 1>, scalar_prefetch = 0 : i64, scratch_operands = 3 : i64, tpu.core_type = #tpu.core_type<tc>, window_params = [{transform_indices = @transform_0, window_bounds = array<i64: 16, 128>}, {transform_indices = @transform_1, window_bounds = array<i64: 16, 128>}, {transform_indices = @transform_2, window_bounds = array<i64: 1, 3, 128>}]} {
    %c0_i32 = arith.constant 0 : i32
    %0 = arith.cmpi eq, %arg1, %c0_i32 : i32
    %1 = arith.extui %0 : i1 to i32
    %c0_i32_0 = arith.constant 0 : i32
    %2 = arith.cmpi ne, %1, %c0_i32_0 : i32
    scf.if %2 {
      %cst_21 = arith.constant 0.000000e+00 : f32
      %29 = vector.broadcast %cst_21 : f32 to vector<1x128xf32>
      %c0_22 = arith.constant 0 : index
      %c0_23 = arith.constant 0 : index
      %30 = vector.load %arg5[%c0_22, %c0_23] : memref<1x128xf32, #tpu.memory_space<vmem>>, vector<1x128xf32>
      tpu.vector_store %arg5[%c0_22, %c0_23], %29 {strides = array<i32>} : memref<1x128xf32, #tpu.memory_space<vmem>>, vector<1x128xf32>,
      %cst_24 = arith.constant 0.000000e+00 : f32
      %31 = vector.broadcast %cst_24 : f32 to vector<1x128xf32>
      %c0_25 = arith.constant 0 : index
      %c0_26 = arith.constant 0 : index
      %32 = vector.load %arg6[%c0_25, %c0_26] : memref<1x128xf32, #tpu.memory_space<vmem>>, vector<1x128xf32>
      tpu.vector_store %arg6[%c0_25, %c0_26], %31 {strides = array<i32>} : memref<1x128xf32, #tpu.memory_space<vmem>>, vector<1x128xf32>,
      %cst_27 = arith.constant 0.000000e+00 : f32
      %33 = vector.broadcast %cst_27 : f32 to vector<1x128xf32>
      %c0_28 = arith.constant 0 : index
      %c0_29 = arith.constant 0 : index
      %34 = vector.load %arg7[%c0_28, %c0_29] : memref<1x128xf32, #tpu.memory_space<vmem>>, vector<1x128xf32>
      tpu.vector_store %arg7[%c0_28, %c0_29], %33 {strides = array<i32>} : memref<1x128xf32, #tpu.memory_space<vmem>>, vector<1x128xf32>,
    } else {
    }
    %c0 = arith.constant 0 : index
    %c0_1 = arith.constant 0 : index
    %3 = vector.load %arg2[%c0, %c0_1] : memref<16x128xf32, #tpu.memory_space<vmem>>, vector<16x128xf32>
    %4 = arith.negf %3 : vector<16x128xf32>
    %5 = math.exp %4 : vector<16x128xf32>
    %cst = arith.constant 1.000000e+00 : f32
    %6 = vector.broadcast %cst : f32 to vector<16x128xf32>
    %7 = arith.addf %6, %5 : vector<16x128xf32>
    %8 = arith.divf %6, %7 : vector<16x128xf32>
    %c0_2 = arith.constant 0 : index
    %c0_3 = arith.constant 0 : index
    %9 = vector.load %arg3[%c0_2, %c0_3] : memref<16x128xf32, #tpu.memory_space<vmem>>, vector<16x128xf32>
    %c0_4 = arith.constant 0 : index
    %c0_5 = arith.constant 0 : index
    %10 = vector.load %arg5[%c0_4, %c0_5] : memref<1x128xf32, #tpu.memory_space<vmem>>, vector<1x128xf32>
    %11 = arith.mulf %8, %9 : vector<16x128xf32>
    %cst_6 = arith.constant dense<0.000000e+00> : vector<128xf32>
    %12 = vector.multi_reduction <add>, %11, %cst_6 [0] : vector<16x128xf32> to vector<128xf32>
    %13 = vector.shape_cast %12 : vector<128xf32> to vector<1x128xf32>
    %14 = arith.addf %10, %13 : vector<1x128xf32>
    %c0_7 = arith.constant 0 : index
    %c0_8 = arith.constant 0 : index
    %15 = vector.load %arg5[%c0_7, %c0_8] : memref<1x128xf32, #tpu.memory_space<vmem>>, vector<1x128xf32>
    tpu.vector_store %arg5[%c0_7, %c0_8], %14 {strides = array<i32>} : memref<1x128xf32, #tpu.memory_space<vmem>>, vector<1x128xf32>,
    %c0_9 = arith.constant 0 : index
    %c0_10 = arith.constant 0 : index
    %16 = vector.load %arg6[%c0_9, %c0_10] : memref<1x128xf32, #tpu.memory_space<vmem>>, vector<1x128xf32>
    %cst_11 = arith.constant dense<0.000000e+00> : vector<128xf32>
    %17 = vector.multi_reduction <add>, %8, %cst_11 [0] : vector<16x128xf32> to vector<128xf32>
    %18 = vector.shape_cast %17 : vector<128xf32> to vector<1x128xf32>
    %19 = arith.addf %16, %18 : vector<1x128xf32>
    %c0_12 = arith.constant 0 : index
    %c0_13 = arith.constant 0 : index
    %20 = vector.load %arg6[%c0_12, %c0_13] : memref<1x128xf32, #tpu.memory_space<vmem>>, vector<1x128xf32>
    tpu.vector_store %arg6[%c0_12, %c0_13], %19 {strides = array<i32>} : memref<1x128xf32, #tpu.memory_space<vmem>>, vector<1x128xf32>,
    %c0_14 = arith.constant 0 : index
    %c0_15 = arith.constant 0 : index
    %21 = vector.load %arg7[%c0_14, %c0_15] : memref<1x128xf32, #tpu.memory_space<vmem>>, vector<1x128xf32>
    %cst_16 = arith.constant dense<0.000000e+00> : vector<128xf32>
    %22 = vector.multi_reduction <add>, %9, %cst_16 [0] : vector<16x128xf32> to vector<128xf32>
    %23 = vector.shape_cast %22 : vector<128xf32> to vector<1x128xf32>
    %24 = arith.addf %21, %23 : vector<1x128xf32>
    %c0_17 = arith.constant 0 : index
    %c0_18 = arith.constant 0 : index
    %25 = vector.load %arg7[%c0_17, %c0_18] : memref<1x128xf32, #tpu.memory_space<vmem>>, vector<1x128xf32>
    tpu.vector_store %arg7[%c0_17, %c0_18], %24 {strides = array<i32>} : memref<1x128xf32, #tpu.memory_space<vmem>>, vector<1x128xf32>,
    %c0_i32_19 = arith.constant 0 : i32
    %26 = arith.cmpi eq, %arg1, %c0_i32_19 : i32
    %27 = arith.extui %26 : i1 to i32
    %c0_i32_20 = arith.constant 0 : i32
    %28 = arith.cmpi ne, %27, %c0_i32_20 : i32
    scf.if %28 {
      %c0_21 = arith.constant 0 : index
      %c0_22 = arith.constant 0 : index
      %29 = vector.load %arg5[%c0_21, %c0_22] : memref<1x128xf32, #tpu.memory_space<vmem>>, vector<1x128xf32>
      %c0_23 = arith.constant 0 : index
      %c0_24 = arith.constant 0 : index
      %c0_25 = arith.constant 0 : index
      %30 = vector.load %arg4[%c0_23, %c0_24, %c0_25] : memref<1x3x128xf32, #tpu.memory_space<vmem>>, vector<1x1x128xf32>
      %31 = vector.shape_cast %30 : vector<1x1x128xf32> to vector<1x128xf32>
      %32 = vector.shape_cast %29 : vector<1x128xf32> to vector<1x1x128xf32>
      tpu.vector_store %arg4[%c0_23, %c0_24, %c0_25], %32 {strides = array<i32>} : memref<1x3x128xf32, #tpu.memory_space<vmem>>, vector<1x1x128xf32>,
      %c0_26 = arith.constant 0 : index
      %c0_27 = arith.constant 0 : index
      %33 = vector.load %arg6[%c0_26, %c0_27] : memref<1x128xf32, #tpu.memory_space<vmem>>, vector<1x128xf32>
      %c0_28 = arith.constant 0 : index
      %c1 = arith.constant 1 : index
      %c0_29 = arith.constant 0 : index
      %34 = vector.load %arg4[%c0_28, %c1, %c0_29] : memref<1x3x128xf32, #tpu.memory_space<vmem>>, vector<1x1x128xf32>
      %35 = vector.shape_cast %34 : vector<1x1x128xf32> to vector<1x128xf32>
      %36 = vector.shape_cast %33 : vector<1x128xf32> to vector<1x1x128xf32>
      tpu.vector_store %arg4[%c0_28, %c1, %c0_29], %36 {strides = array<i32>} : memref<1x3x128xf32, #tpu.memory_space<vmem>>, vector<1x1x128xf32>,
      %c0_30 = arith.constant 0 : index
      %c0_31 = arith.constant 0 : index
      %37 = vector.load %arg7[%c0_30, %c0_31] : memref<1x128xf32, #tpu.memory_space<vmem>>, vector<1x128xf32>
      %c0_32 = arith.constant 0 : index
      %c2 = arith.constant 2 : index
      %c0_33 = arith.constant 0 : index
      %38 = vector.load %arg4[%c0_32, %c2, %c0_33] : memref<1x3x128xf32, #tpu.memory_space<vmem>>, vector<1x1x128xf32>
      %39 = vector.shape_cast %38 : vector<1x1x128xf32> to vector<1x128xf32>
      %40 = vector.shape_cast %37 : vector<1x128xf32> to vector<1x1x128xf32>
      tpu.vector_store %arg4[%c0_32, %c2, %c0_33], %40 {strides = array<i32>} : memref<1x3x128xf32, #tpu.memory_space<vmem>>, vector<1x1x128xf32>,
    } else {
    }
    return
  }
  func.func @transform_0(%arg0: i32, %arg1: i32) -> (i32, i32) {
    %c1_i32 = arith.constant 1 : i32
    %0 = arith.muli %arg0, %c1_i32 : i32
    %1 = arith.addi %0, %arg1 : i32
    %c0_i32 = arith.constant 0 : i32
    %c0_i32_0 = arith.constant 0 : i32
    return %1, %c0_i32 : i32, i32
  }
  func.func @transform_1(%arg0: i32, %arg1: i32) -> (i32, i32) {
    %c1_i32 = arith.constant 1 : i32
    %0 = arith.muli %arg0, %c1_i32 : i32
    %1 = arith.addi %0, %arg1 : i32
    %c0_i32 = arith.constant 0 : i32
    %c0_i32_0 = arith.constant 0 : i32
    return %1, %c0_i32 : i32, i32
  }
  func.func @transform_2(%arg0: i32, %arg1: i32) -> (i32, i32, i32) {
    %c0_i32 = arith.constant 0 : i32
    %c0_i32_0 = arith.constant 0 : i32
    %c0_i32_1 = arith.constant 0 : i32
    return %arg0, %c0_i32, %c0_i32_0 : i32, i32, i32
  }
}

</mosaic_0001>

<llo_original>
// kernel: tpu_custom_call.1
$region0: #{tpu_custom_call.1}
  #allocation0 [shape = 'u32[]', space=smem, size = 0x4, offset = 0x4, fixed_abs, tag = 'smem constant byte address 0x4 - core index']
  #allocation1 [shape = 'u32[144,128]{1,0:T(1,128)}', space=vmem, size = 0x12000, scoped, tag = 'internal scratch']
  #allocation2 [shape = 'f32[1,128]{1,0:T(1,128)}', space=vmem, size = 0x200, scoped, tag = 'scratch operand']
  #allocation3 [shape = 'f32[1,128]{1,0:T(1,128)}', space=vmem, size = 0x200, scoped, tag = 'scratch operand']
  #allocation4 [shape = 'f32[1,128]{1,0:T(1,128)}', space=vmem, size = 0x200, scoped, tag = 'scratch operand']
  %s0 = inlined_call_operand.hbm [shape: f32[16,128], index: 0, kind: input, shape index: {}]
  %s1 = inlined_call_operand.hbm [shape: f32[16,128], index: 1, kind: input, shape index: {}]
  %s2 = inlined_call_operand.vmem [shape: f32[1,3,128], index: 2, kind: output, shape index: {}]
  %s3 = sld [smem:[#allocation0]]
  $region34: #{tpu_custom_call.1} parent=0
    _
  %s5 = ssub.s32 1, %s3
  %s6 = scalar_select 0, %s5, %s3
  $region1: #{tpu_custom_call.1} parent=0
    #allocation5 [shape = 'u8[8192]{0}', space=vmem, size = 0x2000, scoped, tag = 'input window, operand 0, single buffered']
    #allocation6 [shape = 's32[1]{0}', space=sflag, size = 0x4, scoped, tag = 'scoped memory for tpu_custom_call.1']
    #allocation7 [shape = 'u8[8192]{0}', space=vmem, size = 0x2000, scoped, tag = 'input window, operand 1, single buffered']
    #allocation8 [shape = 's32[1]{0}', space=sflag, size = 0x4, scoped, tag = 'scoped memory for tpu_custom_call.1']
    %7 = vsyncpa [#allocation6], 0
    %8 = vsyncpa [#allocation8], 0
    // Predicated region
    $region2: #{tpu_custom_call.1} parent=1 // pred_check
      _
    $region3: #{tpu_custom_call.1} parent=1 // pred_check_branch
      %10 = sbr.rel (0) target = $region5
    $region4: #{tpu_custom_call.1} parent=1 // pred_region
      %s11 = sadd.s32 0, 0
      %s12 = smul.u32 2, %s11
      %s14 = ssub.s32 256, 256
      %15 = vsyncadd [#allocation6], %s14
      %s16 = smul.addr %s12, 128
      %s17 = scalar_lea.hbm %s0, %s16
      %s18 = sshll.u32 [#allocation5], 4
      %s19 = int_to_ptr.vmem [resolvable:$true] %s18
      %24 = dma.hbm_to_vmem [thread:$0]  %s17, 256, %s19, [#allocation6], 128, 128, 8
    $region5: #{tpu_custom_call.1} parent=1 // pred_fallthru
      _
    // Predicated region
    $region6: #{tpu_custom_call.1} parent=1 // pred_check
      _
    $region7: #{tpu_custom_call.1} parent=1 // pred_check_branch
      %26 = sbr.rel (0) target = $region9
    $region8: #{tpu_custom_call.1} parent=1 // pred_region
      %s27 = sadd.s32 0, 0
      %s28 = smul.u32 2, %s27
      %s30 = ssub.s32 256, 256
      %31 = vsyncadd [#allocation8], %s30
      %s32 = smul.addr %s28, 128
      %s33 = scalar_lea.hbm %s1, %s32
      %s34 = sshll.u32 [#allocation7], 4
      %s35 = int_to_ptr.vmem [resolvable:$true] %s34
      %40 = dma.hbm_to_vmem [thread:$0]  %s33, 256, %s35, [#allocation8], 128, 128, 8
    $region9: #{tpu_custom_call.1} parent=1 // pred_fallthru
      _
    // Predicated region
    $region10: #{tpu_custom_call.1} parent=1 // pred_check
      _
    $region11: #{tpu_custom_call.1} parent=1 // pred_check_branch
      %42 = sbr.rel (0) target = $region13
    $region12: #{tpu_custom_call.1} parent=1 // pred_region
      %43 = dma.done [#allocation6], 256
    $region13: #{tpu_custom_call.1} parent=1 // pred_fallthru
      _
    // Predicated region
    $region14: #{tpu_custom_call.1} parent=1 // pred_check
      _
    $region15: #{tpu_custom_call.1} parent=1 // pred_check_branch
      %45 = sbr.rel (0) target = $region17
    $region16: #{tpu_custom_call.1} parent=1 // pred_region
      %46 = dma.done [#allocation8], 256
    $region17: #{tpu_custom_call.1} parent=1 // pred_fallthru
      _
    %s47 = sadd.s32 0, 0
    %s48 = smul.u32 2, %s47
    %s49 = sadd.s32 0, 0
    %s50 = smul.u32 2, %s49
    %p51 = scmp.eq.s32.totalorder 0, 0
    // Predicated region
    $region18: #{tpu_custom_call.1} parent=1 // pred_check
      %p52 = pneg %p51
    $region19: #{tpu_custom_call.1} parent=1 // pred_check_branch
      %54 = sbr.rel (%p52) target = $region21
    $region20: #{tpu_custom_call.1} parent=1 // pred_region
      %55 = vst [vmem:[#allocation2] sm:$0x1] 0.0
      %56 = vst [vmem:[#allocation3] sm:$0x1] 0.0
      %57 = vst [vmem:[#allocation4] sm:$0x1] 0.0
    $region21: #{tpu_custom_call.1} parent=1 // pred_fallthru
      _
    %v58 = vld [vmem:[#allocation5] sm:$0xff]
    %v59 = vld [vmem:[#allocation5 + $0x8] sm:$0xff]
    %v60 = vxor.u32 %v58, 2147483648
    %v61 = vxor.u32 %v59, 2147483648
    %v62 = vmul.f32 %v60, 1.442695
    %v63 = vpow.pop %v62
    %v64 = vmul.f32 %v61, 1.442695
    %v65 = vpow.pop %v64
    %v66 = vadd.f32 %v63, 1.0
    %v67 = vadd.f32 %v65, 1.0
    %v68 = vrcp.pop %v66
    %v69 = vmul.f32 1.0, %v68
    %v70 = vrcp.pop %v67
    %v71 = vmul.f32 1.0, %v70
    %v72 = vld [vmem:[#allocation7] sm:$0xff]
    %v73 = vld [vmem:[#allocation7 + $0x8] sm:$0xff]
    %v74 = vld [vmem:[#allocation2] sm:$0x1]
    %v75 = vmul.f32 %v69, %v72
    %v76 = vmul.f32 %v71, %v73
    %v77 = vadd.f32 %v75, %v76
    %v78 = vrot.slane %v77, 4
    %v79 = vadd.f32 %v77, %v78
    %v80 = vrot.slane %v79, 2
    %v81 = vadd.f32 %v79, %v80
    %v82 = vrot.slane %v81, 1
    %v83 = vadd.f32 %v81, %v82
    %v84 = vadd.f32 %v74, %v83
    %85 = vst [vmem:[#allocation2] sm:$0x1] %v84
    %v86 = vld [vmem:[#allocation3] sm:$0x1]
    %v87 = vadd.f32 %v69, %v71
    %v88 = vrot.slane %v87, 4
    %v89 = vadd.f32 %v87, %v88
    %v90 = vrot.slane %v89, 2
    %v91 = vadd.f32 %v89, %v90
    %v92 = vrot.slane %v91, 1
    %v93 = vadd.f32 %v91, %v92
    %v94 = vadd.f32 %v86, %v93
    %95 = vst [vmem:[#allocation3] sm:$0x1] %v94
    %v96 = vld [vmem:[#allocation4] sm:$0x1]
    %v97 = vadd.f32 %v72, %v73
    %v98 = vrot.slane %v97, 4
    %v99 = vadd.f32 %v97, %v98
    %v100 = vrot.slane %v99, 2
    %v101 = vadd.f32 %v99, %v100
    %v102 = vrot.slane %v101, 1
    %v103 = vadd.f32 %v101, %v102
    %v104 = vadd.f32 %v96, %v103
    %105 = vst [vmem:[#allocation4] sm:$0x1] %v104
    // Predicated region
    $region22: #{tpu_custom_call.1} parent=1 // pred_check
      %p106 = pneg %p51
    $region23: #{tpu_custom_call.1} parent=1 // pred_check_branch
      %108 = sbr.rel (%p106) target = $region25
    $region24: #{tpu_custom_call.1} parent=1 // pred_region
      %v109 = vld [vmem:[#allocation2] sm:$0x1]
      %110 = vst [vmem:[%s2] sm:$0x1] %v109
      %v111 = vld [vmem:[#allocation3] sm:$0x1]
      %112 = vst [vmem:[%s2 + $0x1] sm:$0x1] %v111
      %v113 = vld [vmem:[#allocation4] sm:$0x1]
      %114 = vst [vmem:[%s2 + $0x2] sm:$0x1] %v113
    $region25: #{tpu_custom_call.1} parent=1 // pred_fallthru
      _
    // Predicated region
    $region26: #{tpu_custom_call.1} parent=1 // pred_check
      _
    $region27: #{tpu_custom_call.1} parent=1 // pred_check_branch
      %116 = sbr.rel (0) target = $region29
    $region28: #{tpu_custom_call.1} parent=1 // pred_region
      _
    $region29: #{tpu_custom_call.1} parent=1 // pred_fallthru
      _
    // Predicated region
    $region30: #{tpu_custom_call.1} parent=1 // pred_check
      _
    $region31: #{tpu_custom_call.1} parent=1 // pred_check_branch
      %118 = sbr.rel (0) target = $region33
    $region32: #{tpu_custom_call.1} parent=1 // pred_region
      _
    $region33: #{tpu_custom_call.1} parent=1 // pred_fallthru
      _
    %119 = vsyncpa [#allocation6], 1
    %120 = vsyncpa [#allocation8], 1

</llo_original>
